<compile_context>
chip_gen: v7x
topology: tpu7x:2x2x1
jax: 0.10.0
libtpu: 0.0.40
codegen_flags: <defaults>
</compile_context>

<pallas_src>
import jax
import jax.numpy as jnp
from jax.experimental import pallas as pl
from jax.experimental.pallas import tpu as pltpu


def _mlp_scorer_kernel(text_ref, label_ref, w1t_ref, w1l_ref, b1_ref,
                       w2_ref, b2_ref, w3_ref, b3_ref, out_ref):
    TB, C, D = label_ref.shape

    text = text_ref[...].reshape(TB, D)            # (TB, D)   bf16
    label = label_ref[...].reshape(TB * C, D)      # (TB*C, D) bf16

    # ---- Layer 1: split the concatenated input across the two W1 halves. ----
    # TODO(synk): for very small D on v6e/v7x a single (TB*C, 2D)@(2D, H)
    # matmul on a concatenated slab would double MXU fill; kept split here to
    # share the per-row text projection across all C labels.
    t_proj = jnp.dot(text, w1t_ref[...],
                     preferred_element_type=jnp.float32)                 # (TB, H) f32
    tb = t_proj + b1_ref[...]                                            # fold b1 per row
    l_proj = jnp.dot(label, w1l_ref[...],
                     preferred_element_type=jnp.float32)                 # (TB*C, H) f32
    h1 = jnp.maximum(l_proj.reshape(TB, C, -1) + tb[:, None, :], 0.0)    # (TB, C, H)

    # ---- Layer 2 (bf16 operands, f32 accumulation). ----
    h2 = jnp.dot(h1.reshape(TB * C, -1).astype(w2_ref.dtype), w2_ref[...],
                 preferred_element_type=jnp.float32) + b2_ref[...]
    h2 = jnp.maximum(h2, 0.0)                                            # (TB*C, H2)

    # ---- Layer 3 (H2 -> 1): an N=1 MXU matmul is wasteful, so use a VPU
    # broadcast-multiply + lane reduction instead (f32 all the way). ----
    scores = jnp.sum(h2.reshape(TB, C, -1) * w3_ref[...], axis=-1) + b3_ref[...]
    out_ref[...] = scores.reshape(1, 1, TB * C).astype(out_ref.dtype)    # lane-dense row


def _vmem_capacity_bytes():
    try:
        info = pltpu.get_tpu_info()
        cap = getattr(info, "vmem_capacity_bytes", None)
        if cap:
            return int(cap)
    except Exception:
        pass
    return 64 * 2 ** 20   # v7x-safe fallback; also fine on v5e/v6e.


def mlp_scorer(text_rep, label_rep, params, *, block_b=None, interpret=False):
    """scores[b, c] = MLP(concat(text_rep[b], label_rep[b, c]))."""
    w1t, w1l, b1, w2, b2, w3, b3 = params
    B, D = text_rep.shape
    Bl, C, Dl = label_rep.shape
    assert B == Bl and D == Dl, "shape mismatch between text_rep and label_rep"
    H = w1t.shape[1]
    H2 = w2.shape[1]
    assert w1t.shape == (D, H) and w1l.shape == (D, H)
    assert w2.shape == (H, H2) and w3.size == H2 and b3.size == 1

    out_dtype = text_rep.dtype
    mxu_dtype = jnp.bfloat16

    # bf16 MXU operands; biases / final projection stay f32.
    text_in = text_rep.astype(mxu_dtype).reshape(B, 1, D)   # batch leading -> last two
    label_in = label_rep.astype(mxu_dtype)                  # dims of every block are
    w1t_c = w1t.astype(mxu_dtype)                           # full-extent (layout-safe).
    w1l_c = w1l.astype(mxu_dtype)
    w2_c = w2.astype(mxu_dtype)
    b1_r = b1.reshape(1, H).astype(jnp.float32)
    b2_r = b2.reshape(1, H2).astype(jnp.float32)
    w3_r = w3.reshape(1, H2).astype(jnp.float32)
    b3_r = b3.reshape(1, 1).astype(jnp.float32)

    in_bytes = 2                                             # bf16 activations in
    out_bytes = jnp.dtype(out_dtype).itemsize
    weight_bytes = (2 * D * H + H * H2) * 2 + (H + 2 * H2 + 1) * 4   # single-buffered

    vmem_cap = _vmem_capacity_bytes()
    act_budget = max(int(0.70 * vmem_cap) - weight_bytes, 4 * 2 ** 20)

    def act_bytes(bb):
        # Double-buffered input/output tiles + f32 in-kernel intermediates
        # (l_proj/h1, h2, bf16 re-cast of h1) for one grid step.
        label_t = bb * C * D * in_bytes
        text_t = bb * D * in_bytes
        out_t = bb * C * out_bytes
        interm = (bb * C * (2 * H + 2 * H2) + bb * H) * 4
        return 2 * (label_t + text_t + out_t) + interm

    if block_b is None:
        # Largest block whose full working set fits the VMEM budget; cap at
        # B // 2 so the batch grid can split across v7x's two TensorCores.
        cap_b = max(1, B // 2) if B >= 2 else 1
        bb = cap_b
        while bb > 1 and act_bytes(bb) > act_budget:
            bb //= 2
        block_b = max(1, bb)
        # Prefer a divisor of B so label_rep never needs an HBM-side pad.
        div = max(d for d in range(1, block_b + 1) if B % d == 0)
        if div >= max(1, block_b // 2):
            block_b = div
    block_b = int(max(1, min(block_b, B)))

    nb = pl.cdiv(B, block_b)
    b_pad = nb * block_b
    if b_pad != B:
        # Only reached when no good divisor exists; padded rows sliced off below.
        text_in = jnp.pad(text_in, ((0, b_pad - B), (0, 0), (0, 0)))
        label_in = jnp.pad(label_in, ((0, b_pad - B), (0, 0), (0, 0)))

    need = weight_bytes + act_bytes(block_b)
    vmem_limit = int(min(int(0.95 * vmem_cap),
                         max(need + (8 << 20), 32 << 20)))

    def _resident(shape):
        zeros = (0,) * len(shape)
        return pl.BlockSpec(shape, lambda i, z=zeros: z,
                            pipeline_mode=pl.Buffered(1))   # constant block index

    grid_spec = pltpu.PrefetchScalarGridSpec(
        num_scalar_prefetch=0,
        grid=(nb,),
        in_specs=[
            pl.BlockSpec((block_b, 1, D), lambda i: (i, 0, 0)),    # text_rep
            pl.BlockSpec((block_b, C, D), lambda i: (i, 0, 0)),    # label_rep
            _resident((D, H)),                                     # W1 (text half)
            _resident((D, H)),                                     # W1 (label half)
            _resident((1, H)),                                     # b1
            _resident((H, H2)),                                    # W2
            _resident((1, H2)),                                    # b2
            _resident((1, H2)),                                    # W3 (row vector)
            _resident((1, 1)),                                     # b3
        ],
        out_specs=pl.BlockSpec((1, 1, block_b * C), lambda i: (i, 0, 0)),
    )

    out = pl.pallas_call(
        _mlp_scorer_kernel,
        out_shape=jax.ShapeDtypeStruct((nb, 1, block_b * C), out_dtype),
        grid_spec=grid_spec,
        compiler_params=pltpu.CompilerParams(
            dimension_semantics=("parallel",),
            vmem_limit_bytes=vmem_limit,
        ),
        interpret=interpret,
    )(text_in, label_in, w1t_c, w1l_c, b1_r, w2_c, b2_r, w3_r, b3_r)

    return out.reshape(b_pad, C)[:B]


if __name__ == "__main__":
    # Small shapes consistent with the module: batch=2, num_labels=8,
    # hidden_size=32, mlp_hidden_size=256 (module default).
    B, C, D = 2, 8, 32
    H = 256
    H2 = H // 2

    key = jax.random.PRNGKey(0)
    ks = jax.random.split(key, 9)
    text_rep = jax.random.normal(ks[0], (B, D), dtype=jnp.float32)
    label_rep = jax.random.normal(ks[1], (B, C, D), dtype=jnp.float32)

    def init(k, shape, fan_in):
        return jax.random.normal(k, shape, dtype=jnp.float32) / jnp.sqrt(float(fan_in))

    # Parameters in (in_features, out_features) layout; W1 pre-split text/label.
    w1t = init(ks[2], (D, H), 2 * D)
    w1l = init(ks[3], (D, H), 2 * D)
    b1 = init(ks[4], (H,), 2 * D)
    w2 = init(ks[5], (H, H2), H)
    b2 = init(ks[6], (H2,), H)
    w3 = init(ks[7], (H2,), H2)          # final Linear(H2, 1) weight as a vector
    b3 = init(ks[8], (1,), H2)
    params = (w1t, w1l, b1, w2, b2, w3, b3)

    scores = mlp_scorer(text_rep, label_rep, params)
    jax.block_until_ready(scores)
    assert scores.shape == (B, C)

    # Pure-JAX reference mirroring the PyTorch forward. `cast` mimics the
    # kernel's bf16 MXU operands (f32 accumulation) for a tight check; the
    # f32 reference is checked with a looser tolerance that reflects bf16
    # operand rounding.
    def ref_fn(text, labels, cast):
        def c(x):
            return x.astype(cast) if cast is not None else x
        hi = jax.lax.Precision.HIGHEST
        text_b = jnp.broadcast_to(text[:, None, :], labels.shape)
        combined = jnp.concatenate([c(text_b), c(labels)], axis=-1)      # (B, C, 2D)
        w1 = jnp.concatenate([c(w1t), c(w1l)], axis=0)                   # (2D, H)
        h1 = jax.nn.relu(
            jnp.einsum("bcd,dh->bch", combined, w1, precision=hi,
                       preferred_element_type=jnp.float32) + b1)
        h2 = jax.nn.relu(
            jnp.einsum("bch,hk->bck", c(h1), c(w2), precision=hi,
                       preferred_element_type=jnp.float32) + b2)
        return jnp.sum(h2 * w3, axis=-1) + b3[0]                         # (B, C)

    ref_bf16 = ref_fn(text_rep, label_rep, jnp.bfloat16)
    ref_f32 = ref_fn(text_rep, label_rep, None)
    assert jnp.allclose(scores, ref_bf16, atol=5e-3, rtol=5e-3), \
        "mismatch vs bf16-consistent reference"
    assert jnp.allclose(scores, ref_f32, atol=1e-1, rtol=1e-1), \
        "mismatch vs f32 reference"

    print("KERNEL_OK")
</pallas_src>

<mosaic_0001>
module attributes {stable_mosaic.version = 11 : i64} {
  func.func @_mlp_scorer_kernel(%arg0: i32, %arg1: memref<1x1x32xbf16, #tpu.memory_space<vmem>>, %arg2: memref<1x8x32xbf16, #tpu.memory_space<vmem>>, %arg3: memref<32x256xbf16, #tpu.memory_space<vmem>>, %arg4: memref<32x256xbf16, #tpu.memory_space<vmem>>, %arg5: memref<1x256xf32, #tpu.memory_space<vmem>>, %arg6: memref<256x128xbf16, #tpu.memory_space<vmem>>, %arg7: memref<1x128xf32, #tpu.memory_space<vmem>>, %arg8: memref<1x128xf32, #tpu.memory_space<vmem>>, %arg9: memref<1x1xf32, #tpu.memory_space<vmem>>, %arg10: memref<1x1x8xf32, #tpu.memory_space<vmem>>) attributes {dimension_semantics = [#tpu.dimension_semantics<parallel>], iteration_bounds = array<i64: 2>, scalar_prefetch = 0 : i64, scratch_operands = 0 : i64, tpu.core_type = #tpu.core_type<tc>, window_params = [{transform_indices = @transform_0, window_bounds = array<i64: 1, 1, 32>}, {transform_indices = @transform_1, window_bounds = array<i64: 1, 8, 32>}, {pipeline_mode = #tpu.pipeline_mode<synchronous>, transform_indices = @transform_2, window_bounds = array<i64: 32, 256>}, {pipeline_mode = #tpu.pipeline_mode<synchronous>, transform_indices = @transform_3, window_bounds = array<i64: 32, 256>}, {pipeline_mode = #tpu.pipeline_mode<synchronous>, transform_indices = @transform_4, window_bounds = array<i64: 1, 256>}, {pipeline_mode = #tpu.pipeline_mode<synchronous>, transform_indices = @transform_5, window_bounds = array<i64: 256, 128>}, {pipeline_mode = #tpu.pipeline_mode<synchronous>, transform_indices = @transform_6, window_bounds = array<i64: 1, 128>}, {pipeline_mode = #tpu.pipeline_mode<synchronous>, transform_indices = @transform_7, window_bounds = array<i64: 1, 128>}, {pipeline_mode = #tpu.pipeline_mode<synchronous>, transform_indices = @transform_8, window_bounds = array<i64: 1, 1>}, {transform_indices = @transform_9, window_bounds = array<i64: 1, 1, 8>}]} {
    %c0 = arith.constant 0 : index
    %c0_0 = arith.constant 0 : index
    %c0_1 = arith.constant 0 : index
    %0 = vector.load %arg1[%c0, %c0_0, %c0_1] : memref<1x1x32xbf16, #tpu.memory_space<vmem>>, vector<1x1x32xbf16>
    %1 = vector.shape_cast %0 : vector<1x1x32xbf16> to vector<1x32xbf16>
    %c0_2 = arith.constant 0 : index
    %c0_3 = arith.constant 0 : index
    %c0_4 = arith.constant 0 : index
    %2 = vector.load %arg2[%c0_2, %c0_3, %c0_4] : memref<1x8x32xbf16, #tpu.memory_space<vmem>>, vector<1x8x32xbf16>
    %3 = vector.shape_cast %2 : vector<1x8x32xbf16> to vector<8x32xbf16>
    %c0_5 = arith.constant 0 : index
    %c0_6 = arith.constant 0 : index
    %4 = vector.load %arg3[%c0_5, %c0_6] : memref<32x256xbf16, #tpu.memory_space<vmem>>, vector<32x256xbf16>
    %cst = arith.constant dense<0.000000e+00> : vector<1x256xf32>
    %5 = tpu.matmul %1, %4, %cst {dimension_numbers = #tpu.dot_dimension_numbers<[1], [0], [0], [1], [0, 0, 1, 1], [], []>} : vector<1x32xbf16>, vector<32x256xbf16>, vector<1x256xf32> -> vector<1x256xf32>
    %c0_7 = arith.constant 0 : index
    %c0_8 = arith.constant 0 : index
    %6 = vector.load %arg5[%c0_7, %c0_8] : memref<1x256xf32, #tpu.memory_space<vmem>>, vector<1x256xf32>
    %7 = arith.addf %5, %6 : vector<1x256xf32>
    %c0_9 = arith.constant 0 : index
    %c0_10 = arith.constant 0 : index
    %8 = vector.load %arg4[%c0_9, %c0_10] : memref<32x256xbf16, #tpu.memory_space<vmem>>, vector<32x256xbf16>
    %cst_11 = arith.constant dense<0.000000e+00> : vector<8x256xf32>
    %9 = tpu.matmul %3, %8, %cst_11 {dimension_numbers = #tpu.dot_dimension_numbers<[1], [0], [0], [1], [0, 0, 1, 1], [], []>} : vector<8x32xbf16>, vector<32x256xbf16>, vector<8x256xf32> -> vector<8x256xf32>
    %10 = vector.shape_cast %9 : vector<8x256xf32> to vector<1x8x256xf32>
    %11 = vector.shape_cast %7 : vector<1x256xf32> to vector<1x1x256xf32>
    %12 = vector.broadcast %11 : vector<1x1x256xf32> to vector<1x8x256xf32>
    %13 = arith.addf %10, %12 : vector<1x8x256xf32>
    %cst_12 = arith.constant 0.000000e+00 : f32
    %14 = vector.broadcast %cst_12 : f32 to vector<1x8x256xf32>
    %15 = arith.maximumf %13, %14 : vector<1x8x256xf32>
    %16 = vector.shape_cast %15 : vector<1x8x256xf32> to vector<8x256xf32>
    %17 = arith.truncf %16 : vector<8x256xf32> to vector<8x256xbf16>
    %c0_13 = arith.constant 0 : index
    %c0_14 = arith.constant 0 : index
    %18 = vector.load %arg6[%c0_13, %c0_14] : memref<256x128xbf16, #tpu.memory_space<vmem>>, vector<256x128xbf16>
    %cst_15 = arith.constant dense<0.000000e+00> : vector<8x128xf32>
    %19 = tpu.matmul %17, %18, %cst_15 {dimension_numbers = #tpu.dot_dimension_numbers<[1], [0], [0], [1], [0, 0, 1, 1], [], []>} : vector<8x256xbf16>, vector<256x128xbf16>, vector<8x128xf32> -> vector<8x128xf32>
    %c0_16 = arith.constant 0 : index
    %c0_17 = arith.constant 0 : index
    %20 = vector.load %arg7[%c0_16, %c0_17] : memref<1x128xf32, #tpu.memory_space<vmem>>, vector<1x128xf32>
    %21 = vector.broadcast %20 : vector<1x128xf32> to vector<8x128xf32>
    %22 = arith.addf %19, %21 : vector<8x128xf32>
    %cst_18 = arith.constant 0.000000e+00 : f32
    %23 = vector.broadcast %cst_18 : f32 to vector<8x128xf32>
    %24 = arith.maximumf %22, %23 : vector<8x128xf32>
    %25 = vector.shape_cast %24 : vector<8x128xf32> to vector<1x8x128xf32>
    %c0_19 = arith.constant 0 : index
    %c0_20 = arith.constant 0 : index
    %26 = vector.load %arg8[%c0_19, %c0_20] : memref<1x128xf32, #tpu.memory_space<vmem>>, vector<1x128xf32>
    %27 = vector.shape_cast %26 : vector<1x128xf32> to vector<1x1x128xf32>
    %28 = vector.broadcast %27 : vector<1x1x128xf32> to vector<1x8x128xf32>
    %29 = arith.mulf %25, %28 : vector<1x8x128xf32>
    %cst_21 = arith.constant dense<0.000000e+00> : vector<1x8xf32>
    %30 = vector.multi_reduction <add>, %29, %cst_21 [2] : vector<1x8x128xf32> to vector<1x8xf32>
    %c0_22 = arith.constant 0 : index
    %c0_23 = arith.constant 0 : index
    %31 = vector.load %arg9[%c0_22, %c0_23] : memref<1x1xf32, #tpu.memory_space<vmem>>, vector<1x1xf32>
    %32 = vector.broadcast %31 : vector<1x1xf32> to vector<1x8xf32>
    %33 = arith.addf %30, %32 : vector<1x8xf32>
    %34 = vector.shape_cast %33 : vector<1x8xf32> to vector<1x1x8xf32>
    %c0_24 = arith.constant 0 : index
    %c0_25 = arith.constant 0 : index
    %c0_26 = arith.constant 0 : index
    %35 = vector.load %arg10[%c0_24, %c0_25, %c0_26] : memref<1x1x8xf32, #tpu.memory_space<vmem>>, vector<1x1x8xf32>
    tpu.vector_store %arg10[%c0_24, %c0_25, %c0_26], %34 {strides = array<i32>} : memref<1x1x8xf32, #tpu.memory_space<vmem>>, vector<1x1x8xf32>,
    return
  }
  func.func @transform_0(%arg0: i32) -> (i32, i32, i32) {
    %c0_i32 = arith.constant 0 : i32
    %c0_i32_0 = arith.constant 0 : i32
    %c0_i32_1 = arith.constant 0 : i32
    return %arg0, %c0_i32, %c0_i32_0 : i32, i32, i32
  }
  func.func @transform_1(%arg0: i32) -> (i32, i32, i32) {
    %c0_i32 = arith.constant 0 : i32
    %c0_i32_0 = arith.constant 0 : i32
    %c0_i32_1 = arith.constant 0 : i32
    return %arg0, %c0_i32, %c0_i32_0 : i32, i32, i32
  }
  func.func @transform_2(%arg0: i32) -> (i32, i32) {
    %c0_i32 = arith.constant 0 : i32
    %c0_i32_0 = arith.constant 0 : i32
    %c0_i32_1 = arith.constant 0 : i32
    return %c0_i32, %c0_i32_0 : i32, i32
  }
  func.func @transform_3(%arg0: i32) -> (i32, i32) {
    %c0_i32 = arith.constant 0 : i32
    %c0_i32_0 = arith.constant 0 : i32
    %c0_i32_1 = arith.constant 0 : i32
    return %c0_i32, %c0_i32_0 : i32, i32
  }
  func.func @transform_4(%arg0: i32) -> (i32, i32) {
    %c0_i32 = arith.constant 0 : i32
    %c0_i32_0 = arith.constant 0 : i32
    %c0_i32_1 = arith.constant 0 : i32
    return %c0_i32, %c0_i32_0 : i32, i32
  }
  func.func @transform_5(%arg0: i32) -> (i32, i32) {
    %c0_i32 = arith.constant 0 : i32
    %c0_i32_0 = arith.constant 0 : i32
    %c0_i32_1 = arith.constant 0 : i32
    return %c0_i32, %c0_i32_0 : i32, i32
  }
  func.func @transform_6(%arg0: i32) -> (i32, i32) {
    %c0_i32 = arith.constant 0 : i32
    %c0_i32_0 = arith.constant 0 : i32
    %c0_i32_1 = arith.constant 0 : i32
    return %c0_i32, %c0_i32_0 : i32, i32
  }
  func.func @transform_7(%arg0: i32) -> (i32, i32) {
    %c0_i32 = arith.constant 0 : i32
    %c0_i32_0 = arith.constant 0 : i32
    %c0_i32_1 = arith.constant 0 : i32
    return %c0_i32, %c0_i32_0 : i32, i32
  }
  func.func @transform_8(%arg0: i32) -> (i32, i32) {
    %c0_i32 = arith.constant 0 : i32
    %c0_i32_0 = arith.constant 0 : i32
    %c0_i32_1 = arith.constant 0 : i32
    return %c0_i32, %c0_i32_0 : i32, i32
  }
  func.func @transform_9(%arg0: i32) -> (i32, i32, i32) {
    %c0_i32 = arith.constant 0 : i32
    %c0_i32_0 = arith.constant 0 : i32
    %c0_i32_1 = arith.constant 0 : i32
    return %arg0, %c0_i32, %c0_i32_0 : i32, i32, i32
  }
}

</mosaic_0001>

<llo_original>
// kernel: tpu_custom_call.1
$region0: #{tpu_custom_call.1}
  #allocation0 [shape = 'u32[]', space=smem, size = 0x4, offset = 0x4, fixed_abs, tag = 'smem constant byte address 0x4 - core index']
  #allocation1 [shape = 'u32[144,128]{1,0:T(1,128)}', space=vmem, size = 0x12000, scoped, tag = 'internal scratch']
  #allocation2 [shape = 'f32[1,1]{1,0:T(1,128)S(1)}', space=vmem, size = 0x200, scoped, tag = 'scoped memory for tpu_custom_call.1']
  %s0 = inlined_call_operand.vmem [shape: bf16[2,1,32], index: 0, kind: input, shape index: {}]
  %s1 = inlined_call_operand.vmem [shape: bf16[2,8,32], index: 1, kind: input, shape index: {}]
  %s2 = inlined_call_operand.hbm [shape: bf16[32,256], index: 2, kind: input, shape index: {}]
  %s3 = inlined_call_operand.hbm [shape: bf16[32,256], index: 3, kind: input, shape index: {}]
  %s4 = inlined_call_operand.vmem [shape: f32[1,256], index: 4, kind: input, shape index: {}]
  %s5 = inlined_call_operand.hbm [shape: bf16[256,128], index: 5, kind: input, shape index: {}]
  %s6 = inlined_call_operand.vmem [shape: f32[1,128], index: 6, kind: input, shape index: {}]
  %s7 = inlined_call_operand.vmem [shape: f32[1,128], index: 7, kind: input, shape index: {}]
  %s8 = inlined_call_operand.<no memory space> [shape: f32[1,1], index: 8, kind: input, shape index: {}]
  %s9 = inlined_call_operand.hbm [shape: f32[2,1,8], index: 9, kind: output, shape index: {}]
  %s10 = sld [smem:[#allocation0]]
  $region81: #{tpu_custom_call.1} parent=0
    _
  %s12 = ssub.s32 1, %s10
  %s13 = scalar_select 0, %s12, %s10
  %v14 = vstv %s8
  %15 = vst [vmem:[#allocation2] sm:$0x1] %v14
  $region1: #{tpu_custom_call.1} parent=0
    #allocation3 [shape = 'u8[16384]{0}', space=vmem, size = 0x4000, scoped, tag = 'input window, operand 2, single buffered']
    #allocation4 [shape = 's32[2]{0}', space=sflag, size = 0x8, scoped, tag = 'scoped memory for tpu_custom_call.1']
    #allocation5 [shape = 's32[2]{0}', space=sflag, size = 0x8, scoped, tag = 'scoped memory for tpu_custom_call.1']
    #allocation6 [shape = 'u8[16384]{0}', space=vmem, size = 0x4000, scoped, tag = 'input window, operand 3, single buffered']
    #allocation7 [shape = 's32[1]{0}', space=sflag, size = 0x4, scoped, tag = 'scoped memory for tpu_custom_call.1']
    #allocation8 [shape = 'u8[65536]{0}', space=vmem, size = 0x10000, scoped, tag = 'input window, operand 5, single buffered']
    #allocation9 [shape = 'u8[1024]{0}', space=vmem, size = 0x400, scoped, tag = 'output window, operand 0']
    %16 = vsyncpa [#allocation4], 0
    %17 = vsyncpa [#allocation7], 0
    %18 = vsyncpa [#allocation5], 0
    %s19 = scalar_lea.sflag [#allocation5], 1
    %20 = vsyncpa %s19, 0
    loop: start=0, step=1, limit=4
    $region2: #{tpu_custom_call.1} parent=1 // loop_pre_header
      _
    $region3: #{tpu_custom_call.1} parent=1 // loop_header
      %s22 = sphi 0, %s26
      %p23 = scmp.ge.s32.totalorder %s22, 4
      %s32 = sphi 0, %s34
      %s35 = sphi 0, %s32
      %s36 = sphi 0, %s35
      %s52 = sphi 0, %s36
      %s58 = sphi 0, %s60
      %s61 = sphi 0, %s58
      %s62 = sphi 0, %s61
      %s78 = sphi 0, %s62
      %s82 = sphi 0, %s82
      %s84 = sphi 0, %s82
      %s85 = sphi 0, %s84
      %s99 = sphi 0, %s85
      %s103 = sphi 0, %s103
      %s105 = sphi 0, %s103
      %s106 = sphi 0, %s105
      %s120 = sphi 0, %s106
      %s124 = sphi 0, %s124
      %s126 = sphi 0, %s124
      %s127 = sphi 0, %s126
      %s141 = sphi 0, %s127
      %s145 = sphi 0, %s145
      %s147 = sphi 0, %s145
      %s148 = sphi 0, %s147
      %s162 = sphi 0, %s148
      %s166 = sphi 0, %s166
      %s168 = sphi 0, %s166
      %s169 = sphi 0, %s168
      %s183 = sphi 0, %s169
      %s187 = sphi 0, %s187
      %s189 = sphi 0, %s187
      %s190 = sphi 0, %s189
      %s204 = sphi 0, %s190
      %s208 = sphi 0, %s208
      %s210 = sphi 0, %s208
      %s211 = sphi 0, %s210
      %s225 = sphi 0, %s211
      %s231 = sphi 0, %s233
      %s234 = sphi 0, %s231
      %s235 = sphi 0, %s234
      %s251 = sphi 0, %s235
    $region4: #{tpu_custom_call.1} parent=1 // loop_header_branch
      %25 = sbr.rel (%p23) target = $region8
    $region5: #{tpu_custom_call.1} parent=1 // loop_body
      %s27 = ssub.s32 %s22, 1
      %s28 = ssub.s32 %s22, 2
      %s29 = sadd.s32 %s22, 1
      %s30 = ssub.s32 %s22, %s29
      %p31 = scmp.eq.s32.totalorder %s30, 0
      %s33 = sadd.s32 %s32, 1
      %s34 = scalar_select %p31, %s32, %s33
      %p37 = pneg %p31
      %p38 = scmp.eq.s32.totalorder %s22, 1
      %p39 = por %p37, %p38
      %p40 = scmp.ne.s32.totalorder %s32, %s35
      %p41 = scmp.eq.s32.totalorder %s22, 0
      %p42 = por %p40, %p41
      %p43 = scmp.ne.s32.totalorder %s32, %s35
      %p44 = scmp.eq.s32.totalorder %s27, 1
      %p45 = por %p43, %p44
      %p46 = scmp.ne.s32.totalorder %s35, %s36
      %p47 = scmp.eq.s32.totalorder %s27, 0
      %p48 = por %p46, %p47
      %p49 = scmp.ne.s32.totalorder %s35, %s36
      %p50 = scmp.eq.s32.totalorder %s28, 1
      %p51 = por %p49, %p50
      %p53 = scmp.ne.s32.totalorder %s36, %s52
      %p54 = scmp.eq.s32.totalorder %s28, 0
      %p55 = por %p53, %p54
      %s56 = ssub.s32 %s22, %s29
      %p57 = scmp.eq.s32.totalorder %s56, 0
      %s59 = sadd.s32 %s58, 1
      %s60 = scalar_select %p57, %s58, %s59
      %p63 = pneg %p57
      %p64 = scmp.eq.s32.totalorder %s22, 1
      %p65 = por %p63, %p64
      %p66 = scmp.ne.s32.totalorder %s58, %s61
      %p67 = scmp.eq.s32.totalorder %s22, 0
      %p68 = por %p66, %p67
      %p69 = scmp.ne.s32.totalorder %s58, %s61
      %p70 = scmp.eq.s32.totalorder %s27, 1
      %p71 = por %p69, %p70
      %p72 = scmp.ne.s32.totalorder %s61, %s62
      %p73 = scmp.eq.s32.totalorder %s27, 0
      %p74 = por %p72, %p73
      %p75 = scmp.ne.s32.totalorder %s61, %s62
      %p76 = scmp.eq.s32.totalorder %s28, 1
      %p77 = por %p75, %p76
      %p79 = scmp.ne.s32.totalorder %s62, %s78
      %p80 = scmp.eq.s32.totalorder %s28, 0
      %p81 = por %p79, %p80
      %s83 = sadd.s32 %s82, 1
      %p86 = scmp.eq.s32.totalorder %s22, 1
      %p87 = scmp.ne.s32.totalorder %s82, %s84
      %p88 = scmp.eq.s32.totalorder %s22, 0
      %p89 = por %p87, %p88
      %p90 = scmp.ne.s32.totalorder %s82, %s84
      %p91 = scmp.eq.s32.totalorder %s27, 1
      %p92 = por %p90, %p91
      %p93 = scmp.ne.s32.totalorder %s84, %s85
      %p94 = scmp.eq.s32.totalorder %s27, 0
      %p95 = por %p93, %p94
      %p96 = scmp.ne.s32.totalorder %s84, %s85
      %p97 = scmp.eq.s32.totalorder %s28, 1
      %p98 = por %p96, %p97
      %p100 = scmp.ne.s32.totalorder %s85, %s99
      %p101 = scmp.eq.s32.totalorder %s28, 0
      %p102 = por %p100, %p101
      %s104 = sadd.s32 %s103, 1
      %p107 = scmp.eq.s32.totalorder %s22, 1
      %p108 = scmp.ne.s32.totalorder %s103, %s105
      %p109 = scmp.eq.s32.totalorder %s22, 0
      %p110 = por %p108, %p109
      %p111 = scmp.ne.s32.totalorder %s103, %s105
      %p112 = scmp.eq.s32.totalorder %s27, 1
      %p113 = por %p111, %p112
      %p114 = scmp.ne.s32.totalorder %s105, %s106
      %p115 = scmp.eq.s32.totalorder %s27, 0
      %p116 = por %p114, %p115
      %p117 = scmp.ne.s32.totalorder %s105, %s106
      %p118 = scmp.eq.s32.totalorder %s28, 1
      %p119 = por %p117, %p118
      %p121 = scmp.ne.s32.totalorder %s106, %s120
      %p122 = scmp.eq.s32.totalorder %s28, 0
      %p123 = por %p121, %p122
      %s125 = sadd.s32 %s124, 1
      %p128 = scmp.eq.s32.totalorder %s22, 1
      %p129 = scmp.ne.s32.totalorder %s124, %s126
      %p130 = scmp.eq.s32.totalorder %s22, 0
      %p131 = por %p129, %p130
      %p132 = scmp.ne.s32.totalorder %s124, %s126
      %p133 = scmp.eq.s32.totalorder %s27, 1
      %p134 = por %p132, %p133
      %p135 = scmp.ne.s32.totalorder %s126, %s127
      %p136 = scmp.eq.s32.totalorder %s27, 0
      %p137 = por %p135, %p136
      %p138 = scmp.ne.s32.totalorder %s126, %s127
      %p139 = scmp.eq.s32.totalorder %s28, 1
      %p140 = por %p138, %p139
      %p142 = scmp.ne.s32.totalorder %s127, %s141
      %p143 = scmp.eq.s32.totalorder %s28, 0
      %p144 = por %p142, %p143
      %s146 = sadd.s32 %s145, 1
      %p149 = scmp.eq.s32.totalorder %s22, 1
      %p150 = scmp.ne.s32.totalorder %s145, %s147
      %p151 = scmp.eq.s32.totalorder %s22, 0
      %p152 = por %p150, %p151
      %p153 = scmp.ne.s32.totalorder %s145, %s147
      %p154 = scmp.eq.s32.totalorder %s27, 1
      %p155 = por %p153, %p154
      %p156 = scmp.ne.s32.totalorder %s147, %s148
      %p157 = scmp.eq.s32.totalorder %s27, 0
      %p158 = por %p156, %p157
      %p159 = scmp.ne.s32.totalorder %s147, %s148
      %p160 = scmp.eq.s32.totalorder %s28, 1
      %p161 = por %p159, %p160
      %p163 = scmp.ne.s32.totalorder %s148, %s162
      %p164 = scmp.eq.s32.totalorder %s28, 0
      %p165 = por %p163, %p164
      %s167 = sadd.s32 %s166, 1
      %p170 = scmp.eq.s32.totalorder %s22, 1
      %p171 = scmp.ne.s32.totalorder %s166, %s168
      %p172 = scmp.eq.s32.totalorder %s22, 0
      %p173 = por %p171, %p172
      %p174 = scmp.ne.s32.totalorder %s166, %s168
      %p175 = scmp.eq.s32.totalorder %s27, 1
      %p176 = por %p174, %p175
      %p177 = scmp.ne.s32.totalorder %s168, %s169
      %p178 = scmp.eq.s32.totalorder %s27, 0
      %p179 = por %p177, %p178
      %p180 = scmp.ne.s32.totalorder %s168, %s169
      %p181 = scmp.eq.s32.totalorder %s28, 1
      %p182 = por %p180, %p181
      %p184 = scmp.ne.s32.totalorder %s169, %s183
      %p185 = scmp.eq.s32.totalorder %s28, 0
      %p186 = por %p184, %p185
      %s188 = sadd.s32 %s187, 1
      %p191 = scmp.eq.s32.totalorder %s22, 1
      %p192 = scmp.ne.s32.totalorder %s187, %s189
      %p193 = scmp.eq.s32.totalorder %s22, 0
      %p194 = por %p192, %p193
      %p195 = scmp.ne.s32.totalorder %s187, %s189
      %p196 = scmp.eq.s32.totalorder %s27, 1
      %p197 = por %p195, %p196
      %p198 = scmp.ne.s32.totalorder %s189, %s190
      %p199 = scmp.eq.s32.totalorder %s27, 0
      %p200 = por %p198, %p199
      %p201 = scmp.ne.s32.totalorder %s189, %s190
      %p202 = scmp.eq.s32.totalorder %s28, 1
      %p203 = por %p201, %p202
      %p205 = scmp.ne.s32.totalorder %s190, %s204
      %p206 = scmp.eq.s32.totalorder %s28, 0
      %p207 = por %p205, %p206
      %s209 = sadd.s32 %s208, 1
      %p212 = scmp.eq.s32.totalorder %s22, 1
      %p213 = scmp.ne.s32.totalorder %s208, %s210
      %p214 = scmp.eq.s32.totalorder %s22, 0
      %p215 = por %p213, %p214
      %p216 = scmp.ne.s32.totalorder %s208, %s210
      %p217 = scmp.eq.s32.totalorder %s27, 1
      %p218 = por %p216, %p217
      %p219 = scmp.ne.s32.totalorder %s210, %s211
      %p220 = scmp.eq.s32.totalorder %s27, 0
      %p221 = por %p219, %p220
      %p222 = scmp.ne.s32.totalorder %s210, %s211
      %p223 = scmp.eq.s32.totalorder %s28, 1
      %p224 = por %p222, %p223
      %p226 = scmp.ne.s32.totalorder %s211, %s225
      %p227 = scmp.eq.s32.totalorder %s28, 0
      %p228 = por %p226, %p227
      %s229 = ssub.s32 %s22, %s29
      %p230 = scmp.eq.s32.totalorder %s229, 0
      %s232 = sadd.s32 %s231, 1
      %s233 = scalar_select %p230, %s231, %s232
      %p236 = pneg %p230
      %p237 = scmp.eq.s32.totalorder %s22, 1
      %p238 = por %p236, %p237
      %p239 = scmp.ne.s32.totalorder %s231, %s234
      %p240 = scmp.eq.s32.totalorder %s22, 0
      %p241 = por %p239, %p240
      %p242 = scmp.ne.s32.totalorder %s231, %s234
      %p243 = scmp.eq.s32.totalorder %s27, 1
      %p244 = por %p242, %p243
      %p245 = scmp.ne.s32.totalorder %s234, %s235
      %p246 = scmp.eq.s32.totalorder %s27, 0
      %p247 = por %p245, %p246
      %p248 = scmp.ne.s32.totalorder %s234, %s235
      %p249 = scmp.eq.s32.totalorder %s28, 1
      %p250 = por %p248, %p249
      %p252 = scmp.ne.s32.totalorder %s235, %s251
      %p253 = scmp.eq.s32.totalorder %s28, 0
      %p254 = por %p252, %p253
      %p255 = scmp.le.s32.totalorder 1, %s22
      %p256 = scmp.lt.s32.totalorder %s22, 3
      %p257 = pnand %p255, %p256
      %p258 = pneg %p257
      // Predicated region
      $region9: #{tpu_custom_call.1} parent=5 // pred_check
        _
      $region10: #{tpu_custom_call.1} parent=5 // pred_check_branch
        %260 = sbr.rel (%p257) target = $region12
      $region11: #{tpu_custom_call.1} parent=5 // pred_region
        %s261 = ssub.s32 %s22, 1
        // Predicated region
        $region13: #{tpu_custom_call.1} parent=11 // pred_check
          %p262 = pneg %p95
        $region14: #{tpu_custom_call.1} parent=11 // pred_check_branch
          %264 = sbr.rel (%p262) target = $region16
        $region15: #{tpu_custom_call.1} parent=11 // pred_region
          %s266 = ssub.s32 512, 512
          %267 = vsyncadd [#allocation4], %s266
          %s268 = sshll.u32 [#allocation3], 4
          %s269 = int_to_ptr.vmem [resolvable:$true] %s268
          %274 = dma.hbm_to_vmem [thread:$0]  %s2, 512, %s269, [#allocation4], 128, 128, 8
        $region16: #{tpu_custom_call.1} parent=11 // pred_fallthru
          _
        // Predicated region
        $region17: #{tpu_custom_call.1} parent=11 // pred_check
          %p275 = pneg %p116
        $region18: #{tpu_custom_call.1} parent=11 // pred_check_branch
          %277 = sbr.rel (%p275) target = $region20
        $region19: #{tpu_custom_call.1} parent=11 // pred_region
          %s279 = ssub.s32 512, 512
          %280 = vsyncadd [#allocation7], %s279
          %s281 = sshll.u32 [#allocation6], 4
          %s282 = int_to_ptr.vmem [resolvable:$true] %s281
          %287 = dma.hbm_to_vmem [thread:$0]  %s3, 512, %s282, [#allocation7], 128, 128, 8
        $region20: #{tpu_custom_call.1} parent=11 // pred_fallthru
          _
        // Predicated region
        $region21: #{tpu_custom_call.1} parent=11 // pred_check
          %p288 = pneg %p137
        $region22: #{tpu_custom_call.1} parent=11 // pred_check_branch
          %290 = sbr.rel (%p288) target = $region24
        $region23: #{tpu_custom_call.1} parent=11 // pred_region
          _
        $region24: #{tpu_custom_call.1} parent=11 // pred_fallthru
          _
        // Predicated region
        $region25: #{tpu_custom_call.1} parent=11 // pred_check
          %p291 = pneg %p158
        $region26: #{tpu_custom_call.1} parent=11 // pred_check_branch
          %293 = sbr.rel (%p291) target = $region28
        $region27: #{tpu_custom_call.1} parent=11 // pred_region
          %s295 = ssub.s32 2048, 2048
          %296 = vsyncadd [#allocation7], %s295
          %s297 = sshll.u32 [#allocation8], 4
          %s298 = int_to_ptr.vmem [resolvable:$true] %s297
          %303 = dma.hbm_to_vmem [thread:$0]  %s5, 2048, %s298, [#allocation7], 64, 64, 4
        $region28: #{tpu_custom_call.1} parent=11 // pred_fallthru
          _
        // Predicated region
        $region29: #{tpu_custom_call.1} parent=11 // pred_check
          %p304 = pneg %p179
        $region30: #{tpu_custom_call.1} parent=11 // pred_check_branch
          %306 = sbr.rel (%p304) target = $region32
        $region31: #{tpu_custom_call.1} parent=11 // pred_region
          _
        $region32: #{tpu_custom_call.1} parent=11 // pred_fallthru
          _
        // Predicated region
        $region33: #{tpu_custom_call.1} parent=11 // pred_check
          %p307 = pneg %p200
        $region34: #{tpu_custom_call.1} parent=11 // pred_check_branch
          %309 = sbr.rel (%p307) target = $region36
        $region35: #{tpu_custom_call.1} parent=11 // pred_region
          _
        $region36: #{tpu_custom_call.1} parent=11 // pred_fallthru
          _
        // Predicated region
        $region37: #{tpu_custom_call.1} parent=11 // pred_check
          %p310 = pneg %p221
        $region38: #{tpu_custom_call.1} parent=11 // pred_check_branch
          %312 = sbr.rel (%p310) target = $region40
        $region39: #{tpu_custom_call.1} parent=11 // pred_region
          _
        $region40: #{tpu_custom_call.1} parent=11 // pred_fallthru
          _
      $region12: #{tpu_custom_call.1} parent=5 // pred_fallthru
        _
      %p313 = scmp.lt.s32.totalorder %s22, 2
      // Predicated region
      $region41: #{tpu_custom_call.1} parent=5 // pred_check
        %p314 = pneg %p313
      $region42: #{tpu_custom_call.1} parent=5 // pred_check_branch
        %316 = sbr.rel (%p314) target = $region44
      $region43: #{tpu_custom_call.1} parent=5 // pred_region
        // Predicated region
        $region45: #{tpu_custom_call.1} parent=43 // pred_check
          %p317 = pneg %p42
        $region46: #{tpu_custom_call.1} parent=43 // pred_check_branch
          %319 = sbr.rel (%p317) target = $region48
        $region47: #{tpu_custom_call.1} parent=43 // pred_region
          %p320 = scmp.lt.s32.totalorder %s22, 1
          %s321 = scalar_select %p320, %s22, 1
          %s322 = scalar_lea.vmem %s0, %s321
        $region48: #{tpu_custom_call.1} parent=43 // pred_fallthru
          _
        // Predicated region
        $region49: #{tpu_custom_call.1} parent=43 // pred_check
          %p323 = pneg %p68
        $region50: #{tpu_custom_call.1} parent=43 // pred_check_branch
          %325 = sbr.rel (%p323) target = $region52
        $region51: #{tpu_custom_call.1} parent=43 // pred_region
          %p326 = scmp.lt.s32.totalorder %s22, 1
          %s327 = scalar_select %p326, %s22, 1
          %s328 = smul.addr %s327, 4
          %s329 = scalar_lea.vmem %s1, %s328
        $region52: #{tpu_custom_call.1} parent=43 // pred_fallthru
          _
      $region44: #{tpu_custom_call.1} parent=5 // pred_fallthru
        _
      %p330 = scmp.le.s32.totalorder 1, %s22
      %p331 = scmp.lt.s32.totalorder %s22, 3
      %p332 = pnand %p330, %p331
      %p333 = pneg %p332
      // Predicated region
      $region53: #{tpu_custom_call.1} parent=5 // pred_check
        _
      $region54: #{tpu_custom_call.1} parent=5 // pred_check_branch
        %335 = sbr.rel (%p332) target = $region56
      $region55: #{tpu_custom_call.1} parent=5 // pred_region
        %s336 = ssub.s32 %s22, 1
        // Predicated region
        $region57: #{tpu_custom_call.1} parent=55 // pred_check
          %p337 = pneg %p95
        $region58: #{tpu_custom_call.1} parent=55 // pred_check_branch
          %339 = sbr.rel (%p337) target = $region60
        $region59: #{tpu_custom_call.1} parent=55 // pred_region
          %340 = dma.done [#allocation4], 512
        $region60: #{tpu_custom_call.1} parent=55 // pred_fallthru
          _
        // Predicated region
        $region61: #{tpu_custom_call.1} parent=55 // pred_check
          %p341 = pneg %p116
        $region62: #{tpu_custom_call.1} parent=55 // pred_check_branch
          %343 = sbr.rel (%p341) target = $region64
        $region63: #{tpu_custom_call.1} parent=55 // pred_region
          %344 = dma.done [#allocation7], 512
        $region64: #{tpu_custom_call.1} parent=55 // pred_fallthru
          _
        // Predicated region
        $region65: #{tpu_custom_call.1} parent=55 // pred_check
          %p345 = pneg %p158
        $region66: #{tpu_custom_call.1} parent=55 // pred_check_branch
          %347 = sbr.rel (%p345) target = $region68
        $region67: #{tpu_custom_call.1} parent=55 // pred_region
          %348 = dma.done [#allocation7], 2048
        $region68: #{tpu_custom_call.1} parent=55 // pred_fallthru
          _
        %p349 = scmp.lt.s32.totalorder %s27, 1
        %s350 = scalar_select %p349, %s27, 1
        %s351 = scalar_lea.vmem %s0, %s350
        %p352 = pneg %p48
        %p353 = pneg %p45
        %p354 = scmp.lt.s32.totalorder %s27, 1
        %s355 = scalar_select %p354, %s27, 1
        %s356 = smul.addr %s355, 4
        %s357 = scalar_lea.vmem %s1, %s356
        %p358 = pneg %p74
        %p359 = pneg %p71
        %p360 = pneg %p95
        %p361 = pneg %p92
        %p362 = pneg %p116
        %p363 = pneg %p113
        %p364 = pneg %p137
        %p365 = pneg %p134
        %p366 = pneg %p158
        %p367 = pneg %p155
        %p368 = pneg %p179
        %p369 = pneg %p176
        %p370 = pneg %p200
        %p371 = pneg %p197
        %p372 = pneg %p221
        %p373 = pneg %p218
        %p374 = pneg %p247
        %p375 = pneg %p244
        %s376 = sand.u32 %s234, 1
        %s377 = scalar_lea.sflag [#allocation5], %s376
        %s378 = sand.u32 %s234, 1
        %s379 = scalar_lea.vmem [#allocation9], %s378
        %p380 = scmp.lt.s32.totalorder %s27, 1
        %s381 = scalar_select %p380, %s27, 1
        %s382 = scalar_lea.vmem %s0, %s381
        %p383 = scmp.lt.s32.totalorder %s27, 1
        %s384 = scalar_select %p383, %s27, 1
        %s385 = smul.addr %s384, 4
        %s386 = scalar_lea.vmem %s1, %s385
        %v388 = vld [vmem:[%s382] sm:$0x1]
        %v389 = vld [vmem:[%s386] sm:$0xf]
        %v390 = vld [vmem:[#allocation3] sm:$0xff]
        %v391 = vld [vmem:[#allocation3 + $0x8] sm:$0xff]
        %v392 = vld [vmem:[#allocation3 + $0x10] sm:$0xff]
        %v393 = vld [vmem:[#allocation3 + $0x18] sm:$0xff]
        %v394 = vld [vmem:[%s4] sm:$0x3]
        %v399 = vunpack.c.l.b16 %v390
        %v400 = vunpack.c.h.b16 %v390
        %v401 = vunpack.c.l.b16 %v391
        %v402 = vunpack.c.h.b16 %v391
        %v403 = vunpack.c.l.b16 %v392
        %v404 = vunpack.c.h.b16 %v392
        %v405 = vunpack.c.l.b16 %v393
        %v406 = vunpack.c.h.b16 %v393
        %v407 = vpack.c.b16 %v401, %v399
        %v408 = vpack.c.b16 %v402, %v400
        %v409 = vpack.c.b16 %v405, %v403
        %v410 = vpack.c.b16 %v406, %v404
        %v416 = vlaneseq
        %v417 = vshrl.u32 %v416, 7
        %v418 = vsub.s32 0, %v417
        %v419 = vrot.slane %v394, %v418
        %v420 = vlaneseq
        %v421 = vshrl.u32 %v420, 7
        %v422 = vsub.s32 1, %v421
        %v423 = vrot.slane %v394, %v422
        %vm426 = vcmask 261120
        %v428 = vsel %vm426, %v388, 0
        %430 = vmatprep.subr.bf16.mxu0 %v408
        %431 = vmatpush1.bf16.msra.mxu0 %v407
        %432 = vmatprep.subr.bf16.mxu0 %v410
        %433 = vmatpush1.bf16.msra.mxu0 %v409
        %434 = vmatprep.subr.bf16.mxu0 0
        %435 = vmatpush1.bf16.msra.mxu0 0
        %436 = vmatprep.subr.bf16.mxu0 0
        %437 = vmatpush1.bf16.msra.mxu0 0
        %438 = vmatprep.subr.bf16.mxu0 0
        %439 = vmatpush1.bf16.msra.mxu0 0
        %440 = vmatprep.subr.bf16.mxu0 0
        %441 = vmatpush1.bf16.msra.mxu0 0
        %442 = vmatprep.subr.bf16.mxu0 0
        %443 = vmatpush1.bf16.msra.mxu0 0
        %444 = vmatprep.subr.bf16.mxu0 0
        %445 = vmatpush1.bf16.msra.mxu0 0
        %446 = vmatprep.subr.bf16.mxu0 0
        %447 = vmatpush1.bf16.msra.mxu0 0
        %448 = vmatprep.subr.bf16.mxu0 0
        %449 = vmatpush1.bf16.msra.mxu0 0
        %450 = vmatprep.subr.bf16.mxu0 0
        %451 = vmatpush1.bf16.msra.mxu0 0
        %452 = vmatprep.subr.bf16.mxu0 0
        %453 = vmatpush1.bf16.msra.mxu0 0
        %454 = vmatprep.subr.bf16.mxu0 0
        %455 = vmatpush1.bf16.msra.mxu0 0
        %456 = vmatprep.subr.bf16.mxu0 0
        %457 = vmatpush1.bf16.msra.mxu0 0
        %458 = vmatprep.subr.bf16.mxu0 0
        %459 = vmatpush1.bf16.msra.mxu0 0
        %460 = vmatprep.subr.bf16.mxu0 0
        %461 = vmatpush1.bf16.msra.mxu0 0
        %462 = vmatprep.mubr.bf16.mxu0 0
        %463 = vmatmul.mubr.bf16.gmra.mrb[0].mxu0 %v428
        %v464 = vpop.f32.mrb[0].mxu0
        %v465 = vadd.f32 %v419, %v464
        %v466 = vpop.f32.mrb[0].mxu0
        %v467 = vadd.f32 %v423, %v466
        %v468 = vpop.f32.mrb[0].mxu0
        %v469 = vpop.f32.mrb[0].mxu0
        %470 = vdwg.mxu0
        %v471 = vld [vmem:[#allocation6] sm:$0xff]
        %v472 = vld [vmem:[#allocation6 + $0x8] sm:$0xff]
        %v473 = vld [vmem:[#allocation6 + $0x10] sm:$0xff]
        %v474 = vld [vmem:[#allocation6 + $0x18] sm:$0xff]
        %v479 = vunpack.c.l.b16 %v471
        %v480 = vunpack.c.h.b16 %v471
        %v481 = vunpack.c.l.b16 %v472
        %v482 = vunpack.c.h.b16 %v472
        %v483 = vunpack.c.l.b16 %v473
        %v484 = vunpack.c.h.b16 %v473
        %v485 = vunpack.c.l.b16 %v474
        %v486 = vunpack.c.h.b16 %v474
        %v487 = vpack.c.b16 %v481, %v479
        %v488 = vpack.c.b16 %v482, %v480
        %v489 = vpack.c.b16 %v485, %v483
        %v490 = vpack.c.b16 %v486, %v484
        %v496 = vsel %vm426, %v389, 0
        %498 = vmatprep.subr.bf16.mxu0 %v488
        %499 = vmatpush1.bf16.msra.mxu0 %v487
        %500 = vmatprep.subr.bf16.mxu0 %v490
        %501 = vmatpush1.bf16.msra.mxu0 %v489
        %502 = vmatprep.subr.bf16.mxu0 0
        %503 = vmatpush1.bf16.msra.mxu0 0
        %504 = vmatprep.subr.bf16.mxu0 0
        %505 = vmatpush1.bf16.msra.mxu0 0
        %506 = vmatprep.subr.bf16.mxu0 0
        %507 = vmatpush1.bf16.msra.mxu0 0
        %508 = vmatprep.subr.bf16.mxu0 0
        %509 = vmatpush1.bf16.msra.mxu0 0
        %510 = vmatprep.subr.bf16.mxu0 0
        %511 = vmatpush1.bf16.msra.mxu0 0
        %512 = vmatprep.subr.bf16.mxu0 0
        %513 = vmatpush1.bf16.msra.mxu0 0
        %514 = vmatprep.subr.bf16.mxu0 0
        %515 = vmatpush1.bf16.msra.mxu0 0
        %516 = vmatprep.subr.bf16.mxu0 0
        %517 = vmatpush1.bf16.msra.mxu0 0
        %518 = vmatprep.subr.bf16.mxu0 0
        %519 = vmatpush1.bf16.msra.mxu0 0
        %520 = vmatprep.subr.bf16.mxu0 0
        %521 = vmatpush1.bf16.msra.mxu0 0
        %522 = vmatprep.subr.bf16.mxu0 0
        %523 = vmatpush1.bf16.msra.mxu0 0
        %524 = vmatprep.subr.bf16.mxu0 0
        %525 = vmatpush1.bf16.msra.mxu0 0
        %526 = vmatprep.subr.bf16.mxu0 0
        %527 = vmatpush1.bf16.msra.mxu0 0
        %528 = vmatprep.subr.bf16.mxu0 0
        %529 = vmatpush1.bf16.msra.mxu0 0
        %530 = vmatprep.mubr.bf16.mxu0 0
        %531 = vmatmul.mubr.bf16.gmra.mrb[0].mxu0 %v496
        %v532 = vpop.f32.mrb[0].mxu0
        %v533 = vadd.f32 0.0, %v532
        %v534 = vpop.f32.mrb[0].mxu0
        %v535 = vadd.f32 0.0, %v534
        %v536 = vpop.f32.mrb[0].mxu0
        %v537 = vpop.f32.mrb[0].mxu0
        %538 = vdwg.mxu0
        %v539 = vlaneseq
        %v540 = vshrl.u32 %v539, 7
        %v541 = vsub.s32 0, %v540
        %v542 = vrot.slane %v465, %v541
        %v543 = vlaneseq
        %v544 = vshrl.u32 %v543, 7
        %v545 = vsub.s32 0, %v544
        %v546 = vrot.slane %v467, %v545
        %v547 = vadd.f32 %v533, %v542
        %v548 = vadd.f32 %v535, %v546
        %v549 = vmax.f32 %v547, 0.0
        %v550 = vmax.f32 %v548, 0.0
        %v551 = vpack.c.bf16 %v549, %v549
        %v552 = vpack.c.bf16 %v550, %v550
        %v553 = vld [vmem:[#allocation8] sm:$0xf]
        %v554 = vld [vmem:[#allocation8 + $0x4] sm:$0xf]
        %v555 = vld [vmem:[#allocation8 + $0x8] sm:$0xf]
        %v556 = vld [vmem:[#allocation8 + $0xc] sm:$0xf]
        %v557 = vld [vmem:[#allocation8 + $0x10] sm:$0xf]
        %v558 = vld [vmem:[#allocation8 + $0x14] sm:$0xf]
        %v559 = vld [vmem:[#allocation8 + $0x18] sm:$0xf]
        %v560 = vld [vmem:[#allocation8 + $0x1c] sm:$0xf]
        %v561 = vld [vmem:[#allocation8 + $0x20] sm:$0xf]
        %v562 = vld [vmem:[#allocation8 + $0x24] sm:$0xf]
        %v563 = vld [vmem:[#allocation8 + $0x28] sm:$0xf]
        %v564 = vld [vmem:[#allocation8 + $0x2c] sm:$0xf]
        %v565 = vld [vmem:[#allocation8 + $0x30] sm:$0xf]
        %v566 = vld [vmem:[#allocation8 + $0x34] sm:$0xf]
        %v567 = vld [vmem:[#allocation8 + $0x38] sm:$0xf]
        %v568 = vld [vmem:[#allocation8 + $0x3c] sm:$0xf]
        %v569 = vld [vmem:[#allocation8 + $0x40] sm:$0xf]
        %v570 = vld [vmem:[#allocation8 + $0x44] sm:$0xf]
        %v571 = vld [vmem:[#allocation8 + $0x48] sm:$0xf]
        %v572 = vld [vmem:[#allocation8 + $0x4c] sm:$0xf]
        %v573 = vld [vmem:[#allocation8 + $0x50] sm:$0xf]
        %v574 = vld [vmem:[#allocation8 + $0x54] sm:$0xf]
        %v575 = vld [vmem:[#allocation8 + $0x58] sm:$0xf]
        %v576 = vld [vmem:[#allocation8 + $0x5c] sm:$0xf]
        %v577 = vld [vmem:[#allocation8 + $0x60] sm:$0xf]
        %v578 = vld [vmem:[#allocation8 + $0x64] sm:$0xf]
        %v579 = vld [vmem:[#allocation8 + $0x68] sm:$0xf]
        %v580 = vld [vmem:[#allocation8 + $0x6c] sm:$0xf]
        %v581 = vld [vmem:[#allocation8 + $0x70] sm:$0xf]
        %v582 = vld [vmem:[#allocation8 + $0x74] sm:$0xf]
        %v583 = vld [vmem:[#allocation8 + $0x78] sm:$0xf]
        %v584 = vld [vmem:[#allocation8 + $0x7c] sm:$0xf]
        %v585 = vld [vmem:[%s6] sm:$0x1]
        %v587 = vlaneseq
        %v588 = vshrl.u32 %v587, 7
        %v589 = vsub.s32 0, %v588
        %v590 = vrot.slane %v585, %v589
        %v624 = vunpack.c.l.b16 %v553
        %v625 = vunpack.c.l.b16 %v554
        %v626 = vunpack.c.l.b16 %v555
        %v627 = vunpack.c.l.b16 %v556
        %v628 = vunpack.c.l.b16 %v557
        %v629 = vunpack.c.l.b16 %v558
        %v630 = vunpack.c.l.b16 %v559
        %v631 = vunpack.c.l.b16 %v560
        %v632 = vunpack.c.l.b16 %v561
        %v633 = vunpack.c.l.b16 %v562
        %v634 = vunpack.c.l.b16 %v563
        %v635 = vunpack.c.l.b16 %v564
        %v636 = vunpack.c.l.b16 %v565
        %v637 = vunpack.c.l.b16 %v566
        %v638 = vunpack.c.l.b16 %v567
        %v639 = vunpack.c.l.b16 %v568
        %v640 = vunpack.c.l.b16 %v569
        %v641 = vunpack.c.l.b16 %v570
        %v642 = vunpack.c.l.b16 %v571
        %v643 = vunpack.c.l.b16 %v572
        %v644 = vunpack.c.l.b16 %v573
        %v645 = vunpack.c.l.b16 %v574
        %v646 = vunpack.c.l.b16 %v575
        %v647 = vunpack.c.l.b16 %v576
        %v648 = vunpack.c.l.b16 %v577
        %v649 = vunpack.c.l.b16 %v578
        %v650 = vunpack.c.l.b16 %v579
        %v651 = vunpack.c.l.b16 %v580
        %v652 = vunpack.c.l.b16 %v581
        %v653 = vunpack.c.l.b16 %v582
        %v654 = vunpack.c.l.b16 %v583
        %v655 = vunpack.c.l.b16 %v584
        %v656 = vpack.c.b16 %v625, %v624
        %v657 = vpack.c.b16 %v627, %v626
        %v658 = vpack.c.b16 %v629, %v628
        %v659 = vpack.c.b16 %v631, %v630
        %v660 = vpack.c.b16 %v633, %v632
        %v661 = vpack.c.b16 %v635, %v634
        %v662 = vpack.c.b16 %v637, %v636
        %v663 = vpack.c.b16 %v639, %v638
        %v664 = vpack.c.b16 %v641, %v640
        %v665 = vpack.c.b16 %v643, %v642
        %v666 = vpack.c.b16 %v645, %v644
        %v667 = vpack.c.b16 %v647, %v646
        %v668 = vpack.c.b16 %v649, %v648
        %v669 = vpack.c.b16 %v651, %v650
        %v670 = vpack.c.b16 %v653, %v652
        %v671 = vpack.c.b16 %v655, %v654
        %688 = vmatprep.subr.bf16.mxu0 0
        %689 = vmatpush1.bf16.msra.mxu0 %v656
        %690 = vmatprep.subr.bf16.mxu0 0
        %691 = vmatpush1.bf16.msra.mxu0 %v657
        %692 = vmatprep.subr.bf16.mxu0 0
        %693 = vmatpush1.bf16.msra.mxu0 %v658
        %694 = vmatprep.subr.bf16.mxu0 0
        %695 = vmatpush1.bf16.msra.mxu0 %v659
        %696 = vmatprep.subr.bf16.mxu0 0
        %697 = vmatpush1.bf16.msra.mxu0 %v660
        %698 = vmatprep.subr.bf16.mxu0 0
        %699 = vmatpush1.bf16.msra.mxu0 %v661
        %700 = vmatprep.subr.bf16.mxu0 0
        %701 = vmatpush1.bf16.msra.mxu0 %v662
        %702 = vmatprep.subr.bf16.mxu0 0
        %703 = vmatpush1.bf16.msra.mxu0 %v663
        %704 = vmatprep.subr.bf16.mxu0 0
        %705 = vmatpush1.bf16.msra.mxu0 %v664
        %706 = vmatprep.subr.bf16.mxu0 0
        %707 = vmatpush1.bf16.msra.mxu0 %v665
        %708 = vmatprep.subr.bf16.mxu0 0
        %709 = vmatpush1.bf16.msra.mxu0 %v666
        %710 = vmatprep.subr.bf16.mxu0 0
        %711 = vmatpush1.bf16.msra.mxu0 %v667
        %712 = vmatprep.subr.bf16.mxu0 0
        %713 = vmatpush1.bf16.msra.mxu0 %v668
        %714 = vmatprep.subr.bf16.mxu0 0
        %715 = vmatpush1.bf16.msra.mxu0 %v669
        %716 = vmatprep.subr.bf16.mxu0 0
        %717 = vmatpush1.bf16.msra.mxu0 %v670
        %718 = vmatprep.subr.bf16.mxu0 0
        %719 = vmatpush1.bf16.msra.mxu0 %v671
        %720 = vmatprep.mubr.bf16.mxu0 %v552
        %721 = vmatmul.mubr.bf16.gmra.mrb[0].mxu0 %v551
        %v722 = vpop.f32.mrb[0].mxu0
        %v723 = vadd.f32 %v590, %v722
        %v724 = vpop.f32.mrb[0].mxu0
        %v725 = vpop.f32.mrb[0].mxu0
        %v726 = vpop.f32.mrb[0].mxu0
        %727 = vdwg.mxu0
        %v728 = vmax.f32 %v723, 0.0
        %v729 = vld [vmem:[%s7] sm:$0x1]
        %v731 = vlaneseq
        %v732 = vshrl.u32 %v731, 7
        %v733 = vsub.s32 0, %v732
        %v734 = vrot.slane %v729, %v733
        %v736 = vmul.f32 %v728, %v734
        %737 = vadd.xlane.f32.xlu0 %v736
        %v738 = vpop.xlane.xlu0 %737
        %v739 = vld [vmem:[#allocation2] sm:$0x1]
        %741 = vset.pattern.permute.xlu0 0
        %742 = vperm.xlu0 %741, %v739
        %v743 = vpop.permute.xlu0 %742
        %v745 = vlaneseq
        %v746 = vshrl.u32 %v745, 7
        %v747 = vsub.s32 0, %v746
        %v748 = vrot.slane %v743, %v747
        %v749 = vadd.f32 %v738, %v748
        %v751 = vlaneseq
        %v752 = vand.u32 %v751, 127
        %v753 = vlaneseq
        %v754 = vshrl.u32 %v753, 7
        %v755 = vsub.s32 %v752, %v754
        %v756 = vrot.slane %v749, %v755
        %vm758 = vcmask 57344
        %759 = vst.msk [vmem:[%s379] sm:$0x1] %vm758, %v756
        %s760 = sand.u32 %s234, 1
        %s761 = scalar_lea.sflag [#allocation5], %s760
        %s762 = sand.u32 %s234, 1
        %s763 = scalar_lea.vmem [#allocation9], %s762
        // Predicated region
        $region69: #{tpu_custom_call.1} parent=55 // pred_check
          %p764 = pneg %p244
        $region70: #{tpu_custom_call.1} parent=55 // pred_check_branch
          %766 = sbr.rel (%p764) target = $region72
        $region71: #{tpu_custom_call.1} parent=55 // pred_region
          %s768 = ssub.s32 16, 16
          %769 = vsyncadd %s761, %s768
          %s770 = smul.addr %s27, 16
          %s771 = scalar_lea.hbm %s9, %s770
          %s773 = sshll.u32 %s763, 4
          %s774 = int_to_ptr.vmem [resolvable:$true] %s773
          %776 = dma.vmem_to_hbm [thread:$0]  %s774, 16, %s771, %s761
        $region72: #{tpu_custom_call.1} parent=55 // pred_fallthru
          _
      $region56: #{tpu_custom_call.1} parent=5 // pred_fallthru
        _
      %p777 = scmp.le.s32.totalorder 2, %s22
      // Predicated region
      $region73: #{tpu_custom_call.1} parent=5 // pred_check
        %p778 = pneg %p777
      $region74: #{tpu_custom_call.1} parent=5 // pred_check_branch
        %780 = sbr.rel (%p778) target = $region76
      $region75: #{tpu_custom_call.1} parent=5 // pred_region
        %s781 = ssub.s32 %s22, 2
        // Predicated region
        $region77: #{tpu_custom_call.1} parent=75 // pred_check
          %p782 = pneg %p250
        $region78: #{tpu_custom_call.1} parent=75 // pred_check_branch
          %784 = sbr.rel (%p782) target = $region80
        $region79: #{tpu_custom_call.1} parent=75 // pred_region
          %s785 = sand.u32 %s235, 1
          %s786 = scalar_lea.sflag [#allocation5], %s785
          %s787 = sand.u32 %s235, 1
          %s788 = scalar_lea.vmem [#allocation9], %s787
          %789 = dma.done %s786, 16
        $region80: #{tpu_custom_call.1} parent=75 // pred_fallthru
          _
      $region76: #{tpu_custom_call.1} parent=5 // pred_fallthru
        _
    $region6: #{tpu_custom_call.1} parent=1 // loop_footer
      %s26 = sadd.s32 1, %s22
    $region7: #{tpu_custom_call.1} parent=1 // loop_footer_branch
      %21 = sbr.rel target = $region3
    $region8: #{tpu_custom_call.1} parent=1 // loop_exit
      _
    %790 = vsyncpa [#allocation4], 1
    %s791 = scalar_lea.sflag [#allocation4], 1
    %792 = vsyncpa %s791, 1
    %793 = vsyncpa [#allocation7], 1
    %794 = vsyncpa [#allocation5], 1
    %s795 = scalar_lea.sflag [#allocation5], 1
    %796 = vsyncpa %s795, 1

</llo_original>
